<compile_context>
chip_gen: v5e
topology: v5e:2x2
jax: 0.10.0
libtpu: 0.0.40
codegen_flags: <defaults>
</compile_context>

<pallas_src>
import jax
import jax.numpy as jnp
from jax.experimental import pallas as pl
from jax.experimental.pallas import tpu as pltpu


# --------------------------------------------------------------------------- kernels

def _coord_embed_kernel(coords_ref, wc_ref, h_ref):
    # coords_ref: (1, TN, 2)   wc_ref: (2, D) f32   h_ref: (1, TN, D)
    c = coords_ref[0].astype(jnp.float32)                    # (TN, 2)
    wc = wc_ref[...]                                         # (2, D)
    # K=2 "matmul" as two VPU FMAs (an MXU dot with K=2 would use <2% of the MXU
    # and force an awkward (TN, 2) lane layout).
    h = c[:, 0:1] * wc[0:1, :] + c[:, 1:2] * wc[1:2, :]      # (TN, D) f32
    h_ref[0] = h.astype(h_ref.dtype)


def _dist_embed_kernel(dist_ref, wd_ref, e_ref):
    # dist_ref: (1, TN, TC)   wd_ref: (1, D) f32   e_ref: (1, TN, TC, D)
    d = dist_ref[0].astype(jnp.float32)                      # (TN, TC)
    wd = wd_ref[...]                                         # (1, D)
    # Rank-1 outer product on the VPU; multiply in f32, cast only on the store.
    # Kernel is HBM-write bound on e, so this compute hides under the DMA.
    # TODO(synk): if a bundle dump shows the lane-broadcast of `d` saturating the
    #             XLU, switch to an MXU K=1 outer product (dot((TN*TC,1),(1,D))).
    e = d[:, :, None] * wd[None, :, :]                       # (TN, TC, D) f32
    e_ref[0] = e.astype(e_ref.dtype)


def _dist_embed_flat_kernel(dist_ref, wd_ref, e_ref):
    # Lane-dense variant used when D % 128 != 0: stores a flattened (TN, TC*D)
    # slab so the output last dim is a multiple of 128 (no masked vst.msk stores).
    d = dist_ref[0].astype(jnp.float32)                      # (TN, TC)
    wd = wd_ref[...]                                         # (1, D)
    e = d[:, :, None] * wd[None, :, :]                       # (TN, TC, D) f32
    tn, tc, dd = e.shape
    # TODO(synk): verify this reshape does not introduce an in-kernel relayout;
    #             if it does, compute directly in the flattened layout.
    e_ref[0] = e.reshape(tn, tc * dd).astype(e_ref.dtype)


# --------------------------------------------------------------------------- tiling helpers

def _axis_tiles(n, quantum):
    """Valid block sizes along an axis of length n: multiples of `quantum` that
    divide n, plus the full extent n (always legal for the (8,128) rule)."""
    tiles = [t for t in range(quantum, n + 1, quantum) if n % t == 0]
    tiles.append(n)
    return sorted(set(tiles))


def _pick_row_tile(n, bytes_per_row, target_bytes):
    tiles = _axis_tiles(n, 8)
    fitting = [t for t in tiles if t * bytes_per_row <= target_bytes]
    return max(fitting) if fitting else min(tiles)


def _pick_e_tiles(n, d, e_itemsize, target_bytes):
    """Pick (tn, tc): tn multiple of 8 (or N), tc multiple of 128 (or N), both
    dividing N, maximizing tile area under target_bytes for the e tile."""
    row_tiles = _axis_tiles(n, 8)
    col_tiles = _axis_tiles(n, 128)
    fitting = [(tn * tc, tc, tn)
               for tc in col_tiles for tn in row_tiles
               if tn * tc * d * e_itemsize <= target_bytes]
    if fitting:
        _, tc, tn = max(fitting)
    else:
        tn, tc = min(row_tiles), min(col_tiles)   # smallest legal tile
    return tn, tc


def _default_target_tile_bytes():
    # Generation-aware e-tile target: amortize ~0.35 us/grid-step against HBM BW
    # while leaving VMEM headroom (v7x only has 64 MiB per TC).
    try:
        kind = jax.devices()[0].device_kind.lower()
    except Exception:
        kind = ""
    if "v5" in kind:
        return 6 << 20      # ~0.82 TB/s: write already long; keep VMEM free
    if "v6" in kind:
        return 16 << 20     # ~1.4 TB/s, 128 MiB VMEM
    if "7x" in kind or "v7" in kind:
        return 8 << 20      # ~3.2 TB/s but only 64 MiB VMEM
    return 8 << 20


def _vmem_capacity_bytes():
    try:
        cap = getattr(pltpu.get_tpu_info(), "vmem_capacity_bytes", None)
        if cap:
            return int(cap)
    except Exception:
        pass
    return 64 << 20          # conservative: v7x per-TC VMEM


# --------------------------------------------------------------------------- wrappers

def tsp_coord_embedding(coords, w_coord, h_dtype=None):
    """h = coords @ w_coord.T ; coords (B, N, 2), w_coord (D, 2) (torch layout)."""
    B, N, _ = coords.shape
    D = w_coord.shape[0]
    h_dtype = coords.dtype if h_dtype is None else jnp.dtype(h_dtype)
    wc_t = jnp.asarray(w_coord).T.astype(jnp.float32)        # (2, D), keep f32

    bytes_per_row = D * jnp.dtype(h_dtype).itemsize + 2 * coords.dtype.itemsize
    tn = _pick_row_tile(N, bytes_per_row, 2 << 20)
    grid = (B, N // tn)

    cost = pl.CostEstimate(
        flops=3 * B * N * D,
        transcendentals=0,
        bytes_accessed=B * N * D * jnp.dtype(h_dtype).itemsize
        + B * N * 2 * coords.dtype.itemsize + 2 * D * 4)

    return pl.pallas_call(
        _coord_embed_kernel,
        out_shape=jax.ShapeDtypeStruct((B, N, D), h_dtype),
        grid_spec=pltpu.PrefetchScalarGridSpec(
            num_scalar_prefetch=0,
            grid=grid,
            in_specs=[
                pl.BlockSpec((1, tn, 2), lambda b, i: (b, i, 0)),
                pl.BlockSpec((2, D), lambda b, i: (0, 0)),
            ],
            out_specs=pl.BlockSpec((1, tn, D), lambda b, i: (b, i, 0)),
        ),
        compiler_params=pltpu.CompilerParams(
            dimension_semantics=("parallel", "parallel")),
        cost_estimate=cost,
    )(coords, wc_t)


def tsp_dist_embedding(dist, w_dist, e_dtype=jnp.bfloat16, target_tile_bytes=None):
    """e = dist[..., None] * w_dist[:, 0] ; dist (B, N, N), w_dist (D, 1).
    e_dtype: bf16 by default (halves the dominant HBM write); pass jnp.float32 for
    exact-module numerics, or an fp8 dtype on v7x when downstream consumes fp8."""
    B, N, _ = dist.shape
    D = w_dist.shape[0]
    e_dtype = jnp.dtype(e_dtype)
    wd_row = jnp.asarray(w_dist).reshape(1, D).astype(jnp.float32)   # keep f32

    if target_tile_bytes is None:
        target_tile_bytes = _default_target_tile_bytes()

    e_item = e_dtype.itemsize
    d_item = dist.dtype.itemsize
    tn, tc = _pick_e_tiles(N, D, e_item, target_tile_bytes)
    grid = (B, N // tn, N // tc)

    # VMEM budget: double-buffered e + dist tiles, a possible f32 staging of the
    # e tile before the narrowing cast, weights, compiler scratch headroom.
    tile_e = tn * tc * D * e_item
    tile_d = tn * tc * d_item
    stage = tn * tc * D * 4 if e_item < 4 else 0
    est = 2 * (tile_e + tile_d) + stage + D * 4 + (8 << 20)
    vmem_limit = int(min(max(est, 16 << 20), int(0.75 * _vmem_capacity_bytes())))

    lane_dense = (D % 128 == 0)
    if lane_dense:
        kernel = _dist_embed_kernel
        out_shape = jax.ShapeDtypeStruct((B, N, N, D), e_dtype)
        out_spec = pl.BlockSpec((1, tn, tc, D), lambda b, i, j: (b, i, j, 0))
    else:
        # Lane-dense flatten: present (B, N, N*D) so the stored last dim is a
        # multiple of 128; reshape back below (free, row-major contiguous split).
        kernel = _dist_embed_flat_kernel
        out_shape = jax.ShapeDtypeStruct((B, N, N * D), e_dtype)
        out_spec = pl.BlockSpec((1, tn, tc * D), lambda b, i, j: (b, i, j))

    cost = pl.CostEstimate(
        flops=B * N * N * D,
        transcendentals=0,
        bytes_accessed=B * N * N * D * e_item + B * N * N * d_item + D * 4)

    e = pl.pallas_call(
        kernel,
        out_shape=out_shape,
        grid_spec=pltpu.PrefetchScalarGridSpec(
            num_scalar_prefetch=0,
            grid=grid,
            in_specs=[
                pl.BlockSpec((1, tn, tc), lambda b, i, j: (b, i, j)),
                pl.BlockSpec((1, D), lambda b, i, j: (0, 0)),
            ],
            out_specs=out_spec,
        ),
        compiler_params=pltpu.CompilerParams(
            dimension_semantics=("parallel", "parallel", "parallel"),
            vmem_limit_bytes=vmem_limit),
        cost_estimate=cost,
    )(dist, wd_row)

    if not lane_dense:
        e = e.reshape(B, N, N, D)
    return e


def tsp_encoder_forward(coords, dist, w_coord, w_dist, *,
                        h_dtype=None, e_dtype=jnp.bfloat16,
                        materialize_e=True, target_tile_bytes=None):
    """coords (B, N, 2); dist (B, N, N); w_coord (D, 2); w_dist (D, 1) (torch layout).

    Returns (h, e) with h: (B, N, D) and e: (B, N, N, D), or (h, None) when
    materialize_e=False (fast path: the first GTLayer should rebuild e
    tile-by-tile from (dist, w_dist) instead of re-reading it from HBM)."""
    h = tsp_coord_embedding(coords, w_coord, h_dtype=h_dtype)
    if not materialize_e:
        # TODO(synk): GTLayer is undefined in the source; when it exists, fuse the
        #             rank-1 e construction into its first kernel.
        return h, None
    e = tsp_dist_embedding(dist, w_dist, e_dtype=e_dtype,
                           target_tile_bytes=target_tile_bytes)
    return h, e


# --------------------------------------------------------------------------- demo / check

if __name__ == "__main__":
    key = jax.random.PRNGKey(0)
    k1, k2, k3, k4 = jax.random.split(key, 4)

    D = 128  # realistic embedding_dim (keeps e's last dim lane-dense)
    # PyTorch Linear weight layout: (out_features, in_features)
    w_coord = jax.random.normal(k2, (D, 2), dtype=jnp.float32) * 0.1
    w_dist = jax.random.normal(k3, (D, 1), dtype=jnp.float32) * 0.1

    def make_inputs(k, B, N):
        coords = jax.random.uniform(k, (B, N, 2), dtype=jnp.float32)
        diff = coords[:, :, None, :] - coords[:, None, :, :]
        dist = jnp.sqrt(jnp.sum(diff * diff, axis=-1) + 1e-12)
        return coords, dist

    def reference(coords, dist):
        h_ref = jnp.einsum("bnk,dk->bnd", coords, w_coord)
        e_ref = dist[..., None] * w_dist[:, 0][None, None, None, :]
        return h_ref, e_ref

    # ---- run 1: default path (bf16 e), small N (tc = full extent) -------------
    B, N = 2, 16
    coords, dist = make_inputs(k1, B, N)
    h_ref, e_ref = reference(coords, dist)

    h, e = tsp_encoder_forward(coords, dist, w_coord, w_dist)
    h, e = jax.block_until_ready((h, e))
    assert h.shape == (B, N, D) and e.shape == (B, N, N, D)
    assert jnp.allclose(h, h_ref, atol=1e-5, rtol=1e-5), "h mismatch (run 1)"
    assert jnp.allclose(e.astype(jnp.float32), e_ref, atol=1e-2, rtol=2e-2), \
        "e (bf16) mismatch (run 1)"

    # ---- run 2: f32 e, larger N with a small tile target to exercise the
    #             (row, column) tiling of the e grid ----------------------------
    B2, N2 = 2, 256
    coords2, dist2 = make_inputs(k4, B2, N2)
    h_ref2, e_ref2 = reference(coords2, dist2)

    h2, e2 = tsp_encoder_forward(coords2, dist2, w_coord, w_dist,
                                 e_dtype=jnp.float32,
                                 target_tile_bytes=768 * 1024)
    h2, e2 = jax.block_until_ready((h2, e2))
    assert jnp.allclose(h2, h_ref2, atol=1e-5, rtol=1e-5), "h mismatch (run 2)"
    assert jnp.allclose(e2, e_ref2, atol=1e-5, rtol=1e-5), "e mismatch (run 2)"

    # ---- run 3: fast path, e never materialized --------------------------------
    h3, e3 = tsp_encoder_forward(coords, dist, w_coord, w_dist, materialize_e=False)
    h3 = jax.block_until_ready(h3)
    assert e3 is None
    assert jnp.allclose(h3, h_ref, atol=1e-5, rtol=1e-5), "h mismatch (run 3)"

    print("KERNEL_OK")
</pallas_src>

<mosaic_0001>
module attributes {stable_mosaic.version = 11 : i64} {
  func.func @_coord_embed_kernel(%arg0: i32, %arg1: i32, %arg2: memref<1x16x2xf32, #tpu.memory_space<vmem>>, %arg3: memref<2x128xf32, #tpu.memory_space<vmem>>, %arg4: memref<1x16x128xf32, #tpu.memory_space<vmem>>) attributes {dimension_semantics = [#tpu.dimension_semantics<parallel>, #tpu.dimension_semantics<parallel>], iteration_bounds = array<i64: 2, 1>, scalar_prefetch = 0 : i64, scratch_operands = 0 : i64, tpu.core_type = #tpu.core_type<tc>, window_params = [{transform_indices = @transform_0, window_bounds = array<i64: 1, 16, 2>}, {pipeline_mode = #tpu.pipeline_mode<synchronous>, transform_indices = @transform_1, window_bounds = array<i64: 2, 128>}, {transform_indices = @transform_2, window_bounds = array<i64: 1, 16, 128>}]} {
    %c0 = arith.constant 0 : index
    %c0_0 = arith.constant 0 : index
    %c0_1 = arith.constant 0 : index
    %0 = vector.load %arg2[%c0, %c0_0, %c0_1] : memref<1x16x2xf32, #tpu.memory_space<vmem>>, vector<1x16x2xf32>
    %1 = vector.shape_cast %0 : vector<1x16x2xf32> to vector<16x2xf32>
    %c0_2 = arith.constant 0 : index
    %c0_3 = arith.constant 0 : index
    %2 = vector.load %arg3[%c0_2, %c0_3] : memref<2x128xf32, #tpu.memory_space<vmem>>, vector<2x128xf32>
    %3 = vector.extract_strided_slice %1 {offsets = [0, 0], sizes = [16, 1], strides = [1, 1]} : vector<16x2xf32> to vector<16x1xf32>
    %4 = vector.extract_strided_slice %2 {offsets = [0, 0], sizes = [1, 128], strides = [1, 1]} : vector<2x128xf32> to vector<1x128xf32>
    %5 = vector.broadcast %3 : vector<16x1xf32> to vector<16x128xf32>
    %6 = vector.broadcast %4 : vector<1x128xf32> to vector<16x128xf32>
    %7 = arith.mulf %5, %6 : vector<16x128xf32>
    %8 = vector.extract_strided_slice %1 {offsets = [0, 1], sizes = [16, 1], strides = [1, 1]} : vector<16x2xf32> to vector<16x1xf32>
    %9 = vector.extract_strided_slice %2 {offsets = [1, 0], sizes = [1, 128], strides = [1, 1]} : vector<2x128xf32> to vector<1x128xf32>
    %10 = vector.broadcast %8 : vector<16x1xf32> to vector<16x128xf32>
    %11 = vector.broadcast %9 : vector<1x128xf32> to vector<16x128xf32>
    %12 = arith.mulf %10, %11 : vector<16x128xf32>
    %13 = arith.addf %7, %12 : vector<16x128xf32>
    %c0_4 = arith.constant 0 : index
    %c0_5 = arith.constant 0 : index
    %c0_6 = arith.constant 0 : index
    %14 = vector.load %arg4[%c0_4, %c0_5, %c0_6] : memref<1x16x128xf32, #tpu.memory_space<vmem>>, vector<1x16x128xf32>
    %15 = vector.shape_cast %14 : vector<1x16x128xf32> to vector<16x128xf32>
    %16 = vector.shape_cast %13 : vector<16x128xf32> to vector<1x16x128xf32>
    tpu.vector_store %arg4[%c0_4, %c0_5, %c0_6], %16 {strides = array<i32>} : memref<1x16x128xf32, #tpu.memory_space<vmem>>, vector<1x16x128xf32>,
    return
  }
  func.func @transform_0(%arg0: i32, %arg1: i32) -> (i32, i32, i32) {
    %c0_i32 = arith.constant 0 : i32
    %c0_i32_0 = arith.constant 0 : i32
    return %arg0, %arg1, %c0_i32 : i32, i32, i32
  }
  func.func @transform_1(%arg0: i32, %arg1: i32) -> (i32, i32) {
    %c0_i32 = arith.constant 0 : i32
    %c0_i32_0 = arith.constant 0 : i32
    %c0_i32_1 = arith.constant 0 : i32
    return %c0_i32, %c0_i32_0 : i32, i32
  }
  func.func @transform_2(%arg0: i32, %arg1: i32) -> (i32, i32, i32) {
    %c0_i32 = arith.constant 0 : i32
    %c0_i32_0 = arith.constant 0 : i32
    return %arg0, %arg1, %c0_i32 : i32, i32, i32
  }
}

</mosaic_0001>

<llo_original>
// kernel: tpu_custom_call.1
$region0: #{tpu_custom_call.1}
  #allocation0 [shape = 'u32[]', space=smem, size = 0x4, offset = 0x4, fixed_abs, tag = 'smem constant byte address 0x4 - core index']
  #allocation1 [shape = 'u32[72,128]{1,0:T(1,128)}', space=vmem, size = 0x9000, scoped, tag = 'internal scratch']
  %s0 = inlined_call_operand.vmem [shape: f32[2,16,2], index: 0, kind: input, shape index: {}]
  %s1 = inlined_call_operand.vmem [shape: f32[2,128], index: 1, kind: input, shape index: {}]
  %s2 = inlined_call_operand.hbm [shape: f32[2,16,128], index: 2, kind: output, shape index: {}]
  %s3 = sld [smem:[#allocation0]]
  $region41: #{tpu_custom_call.1} parent=0
    _
  %s5 = ssub.s32 1, %s3
  %s6 = scalar_select 0, %s5, %s3
  $region1: #{tpu_custom_call.1} parent=0
    #allocation2 [shape = 'u8[16384]{0}', space=vmem, size = 0x4000, scoped, tag = 'output window, operand 0']
    #allocation3 [shape = 's32[2]{0}', space=sflag, size = 0x8, scoped, tag = 'scoped memory for tpu_custom_call.1']
    %7 = vsyncpa [#allocation3], 0
    %s8 = scalar_lea.sflag [#allocation3], 1
    %9 = vsyncpa %s8, 0
    loop: start=0, step=1, limit=4
    $region2: #{tpu_custom_call.1} parent=1 // loop_pre_header
      _
    $region3: #{tpu_custom_call.1} parent=1 // loop_header
      %s11 = sphi 0, %s15
      %p12 = scmp.ge.s32.totalorder %s11, 4
      %s18 = sphi 0, %s30
      %s19 = sphi 0, %s26
      %s20 = sphi 0, %s18
      %s21 = sphi 0, %s19
      %s22 = sphi 0, %s20
      %s23 = sphi 0, %s21
      %s35 = sphi 0, %s37
      %s38 = sphi 0, %s35
      %s39 = sphi 0, %s38
      %s55 = sphi 0, %s39
      %s59 = sphi 0, %s59
      %s61 = sphi 0, %s59
      %s62 = sphi 0, %s61
      %s76 = sphi 0, %s62
      %s84 = sphi 0, %s86
      %s87 = sphi 0, %s84
      %s88 = sphi 0, %s87
      %s104 = sphi 0, %s88
    $region4: #{tpu_custom_call.1} parent=1 // loop_header_branch
      %14 = sbr.rel (%p12) target = $region8
    $region5: #{tpu_custom_call.1} parent=1 // loop_body
      %s16 = ssub.s32 %s11, 1
      %s17 = ssub.s32 %s11, 2
      %s24 = sadd.s32 1, %s19
      %p25 = scmp.ge.s32.totalorder %s24, 1
      %s26 = scalar_select %p25, 0, %s24
      %s27 = sadd.s32 1, %s18
      %s28 = scalar_select %p25, %s27, %s18
      %p29 = scmp.ge.s32.totalorder %s28, 2
      %s30 = scalar_select %p29, 0, %s28
      %s31 = ssub.s32 %s18, %s30
      %s32 = ssub.s32 %s19, %s26
      %s33 = sor.u32 %s31, %s32
      %p34 = scmp.eq.s32.totalorder %s33, 0
      %s36 = sadd.s32 %s35, 1
      %s37 = scalar_select %p34, %s35, %s36
      %p40 = pneg %p34
      %p41 = scmp.eq.s32.totalorder %s11, 1
      %p42 = por %p40, %p41
      %p43 = scmp.ne.s32.totalorder %s35, %s38
      %p44 = scmp.eq.s32.totalorder %s11, 0
      %p45 = por %p43, %p44
      %p46 = scmp.ne.s32.totalorder %s35, %s38
      %p47 = scmp.eq.s32.totalorder %s16, 1
      %p48 = por %p46, %p47
      %p49 = scmp.ne.s32.totalorder %s38, %s39
      %p50 = scmp.eq.s32.totalorder %s16, 0
      %p51 = por %p49, %p50
      %p52 = scmp.ne.s32.totalorder %s38, %s39
      %p53 = scmp.eq.s32.totalorder %s17, 1
      %p54 = por %p52, %p53
      %p56 = scmp.ne.s32.totalorder %s39, %s55
      %p57 = scmp.eq.s32.totalorder %s17, 0
      %p58 = por %p56, %p57
      %s60 = sadd.s32 %s59, 1
      %p63 = scmp.eq.s32.totalorder %s11, 1
      %p64 = scmp.ne.s32.totalorder %s59, %s61
      %p65 = scmp.eq.s32.totalorder %s11, 0
      %p66 = por %p64, %p65
      %p67 = scmp.ne.s32.totalorder %s59, %s61
      %p68 = scmp.eq.s32.totalorder %s16, 1
      %p69 = por %p67, %p68
      %p70 = scmp.ne.s32.totalorder %s61, %s62
      %p71 = scmp.eq.s32.totalorder %s16, 0
      %p72 = por %p70, %p71
      %p73 = scmp.ne.s32.totalorder %s61, %s62
      %p74 = scmp.eq.s32.totalorder %s17, 1
      %p75 = por %p73, %p74
      %p77 = scmp.ne.s32.totalorder %s62, %s76
      %p78 = scmp.eq.s32.totalorder %s17, 0
      %p79 = por %p77, %p78
      %s80 = ssub.s32 %s18, %s30
      %s81 = ssub.s32 %s19, %s26
      %s82 = sor.u32 %s80, %s81
      %p83 = scmp.eq.s32.totalorder %s82, 0
      %s85 = sadd.s32 %s84, 1
      %s86 = scalar_select %p83, %s84, %s85
      %p89 = pneg %p83
      %p90 = scmp.eq.s32.totalorder %s11, 1
      %p91 = por %p89, %p90
      %p92 = scmp.ne.s32.totalorder %s84, %s87
      %p93 = scmp.eq.s32.totalorder %s11, 0
      %p94 = por %p92, %p93
      %p95 = scmp.ne.s32.totalorder %s84, %s87
      %p96 = scmp.eq.s32.totalorder %s16, 1
      %p97 = por %p95, %p96
      %p98 = scmp.ne.s32.totalorder %s87, %s88
      %p99 = scmp.eq.s32.totalorder %s16, 0
      %p100 = por %p98, %p99
      %p101 = scmp.ne.s32.totalorder %s87, %s88
      %p102 = scmp.eq.s32.totalorder %s17, 1
      %p103 = por %p101, %p102
      %p105 = scmp.ne.s32.totalorder %s88, %s104
      %p106 = scmp.eq.s32.totalorder %s17, 0
      %p107 = por %p105, %p106
      %p108 = scmp.le.s32.totalorder 1, %s11
      %p109 = scmp.lt.s32.totalorder %s11, 3
      %p110 = pnand %p108, %p109
      %p111 = pneg %p110
      // Predicated region
      $region9: #{tpu_custom_call.1} parent=5 // pred_check
        _
      $region10: #{tpu_custom_call.1} parent=5 // pred_check_branch
        %113 = sbr.rel (%p110) target = $region12
      $region11: #{tpu_custom_call.1} parent=5 // pred_region
        %s114 = ssub.s32 %s11, 1
        // Predicated region
        $region13: #{tpu_custom_call.1} parent=11 // pred_check
          %p115 = pneg %p72
        $region14: #{tpu_custom_call.1} parent=11 // pred_check_branch
          %117 = sbr.rel (%p115) target = $region16
        $region15: #{tpu_custom_call.1} parent=11 // pred_region
          _
        $region16: #{tpu_custom_call.1} parent=11 // pred_fallthru
          _
      $region12: #{tpu_custom_call.1} parent=5 // pred_fallthru
        _
      %p118 = scmp.lt.s32.totalorder %s11, 2
      // Predicated region
      $region17: #{tpu_custom_call.1} parent=5 // pred_check
        %p119 = pneg %p118
      $region18: #{tpu_custom_call.1} parent=5 // pred_check_branch
        %121 = sbr.rel (%p119) target = $region20
      $region19: #{tpu_custom_call.1} parent=5 // pred_region
        // Predicated region
        $region21: #{tpu_custom_call.1} parent=19 // pred_check
          %p122 = pneg %p45
        $region22: #{tpu_custom_call.1} parent=19 // pred_check_branch
          %124 = sbr.rel (%p122) target = $region24
        $region23: #{tpu_custom_call.1} parent=19 // pred_region
          %s125 = smul.u32 2, %s19
          %p126 = scmp.lt.s32.totalorder %s18, 1
          %s127 = scalar_select %p126, %s18, 1
          %p128 = scmp.lt.s32.totalorder %s125, 1
          %s129 = scalar_select %p128, %s125, 1
          %s130 = smul.addr %s127, 2
          %s131 = sadd.s32 %s129, %s130
          %s132 = smul.addr %s131, 8
          %s133 = scalar_lea.vmem %s0, %s132
          %s134 = smul.u32 2, %s19
        $region24: #{tpu_custom_call.1} parent=19 // pred_fallthru
          _
      $region20: #{tpu_custom_call.1} parent=5 // pred_fallthru
        _
      %p135 = scmp.le.s32.totalorder 1, %s11
      %p136 = scmp.lt.s32.totalorder %s11, 3
      %p137 = pnand %p135, %p136
      %p138 = pneg %p137
      // Predicated region
      $region25: #{tpu_custom_call.1} parent=5 // pred_check
        _
      $region26: #{tpu_custom_call.1} parent=5 // pred_check_branch
        %140 = sbr.rel (%p137) target = $region28
      $region27: #{tpu_custom_call.1} parent=5 // pred_region
        %s141 = ssub.s32 %s11, 1
        %s142 = smul.u32 2, %s21
        %p143 = scmp.lt.s32.totalorder %s20, 1
        %s144 = scalar_select %p143, %s20, 1
        %p145 = scmp.lt.s32.totalorder %s142, 1
        %s146 = scalar_select %p145, %s142, 1
        %s147 = smul.addr %s144, 2
        %s148 = sadd.s32 %s146, %s147
        %s149 = smul.addr %s148, 8
        %s150 = scalar_lea.vmem %s0, %s149
        %p151 = pneg %p51
        %p152 = pneg %p48
        %p153 = pneg %p72
        %p154 = pneg %p69
        %p155 = pneg %p100
        %p156 = pneg %p97
        %s157 = sand.u32 %s87, 1
        %s158 = scalar_lea.sflag [#allocation3], %s157
        %s159 = sand.u32 %s87, 1
        %s160 = smul.addr %s159, 16
        %s161 = scalar_lea.vmem [#allocation2], %s160
        %s162 = smul.u32 2, %s21
        %p163 = scmp.lt.s32.totalorder %s20, 1
        %s164 = scalar_select %p163, %s20, 1
        %p165 = scmp.lt.s32.totalorder %s162, 1
        %s166 = scalar_select %p165, %s162, 1
        %s167 = smul.addr %s164, 2
        %s168 = sadd.s32 %s166, %s167
        %s169 = smul.addr %s168, 8
        %s170 = scalar_lea.vmem %s0, %s169
        %s171 = smul.u32 2, %s21
        %s172 = smul.u32 2, %s21
        %v173 = vld [vmem:[%s170] sm:$0xff]
        %v174 = vld [vmem:[%s170 + $0x8] sm:$0xff]
        %v175 = vld [vmem:[%s1] sm:$0x3]
        %177 = vset.pattern.permute.xlu0 0
        %178 = vperm.xlu0 %177, %v173
        %v179 = vpop.permute.xlu0 %178
        %182 = vset.pattern.permute.xlu0 0
        %183 = vperm.xlu0 %182, %v174
        %v184 = vpop.permute.xlu0 %183
        %v186 = vperm.slane %v175, 0
        %v187 = vmul.f32 %v179, %v186
        %v188 = vmul.f32 %v184, %v186
        %189 = vset.pattern.permute.xlu0 1
        %190 = vperm.xlu0 %189, %v173
        %v191 = vpop.permute.xlu0 %190
        %193 = vset.pattern.permute.xlu0 1
        %194 = vperm.xlu0 %193, %v174
        %v195 = vpop.permute.xlu0 %194
        %v197 = vperm.slane %v175, 1
        %v198 = vmul.f32 %v191, %v197
        %v199 = vmul.f32 %v195, %v197
        %v200 = vadd.f32 %v187, %v198
        %v201 = vadd.f32 %v188, %v199
        %202 = vst [vmem:[%s161] sm:$0xff] %v200
        %203 = vst [vmem:[%s161 + $0x8] sm:$0xff] %v201
        %s204 = sand.u32 %s87, 1
        %s205 = scalar_lea.sflag [#allocation3], %s204
        %s206 = sand.u32 %s87, 1
        %s207 = smul.addr %s206, 16
        %s208 = scalar_lea.vmem [#allocation2], %s207
        // Predicated region
        $region29: #{tpu_custom_call.1} parent=27 // pred_check
          %p209 = pneg %p97
        $region30: #{tpu_custom_call.1} parent=27 // pred_check_branch
          %211 = sbr.rel (%p209) target = $region32
        $region31: #{tpu_custom_call.1} parent=27 // pred_region
          %s212 = smul.u32 2, %s21
          %214 = vsyncadd %s205, 0
          %s215 = smul.addr %s20, 2
          %s216 = sadd.s32 %s212, %s215
          %s217 = smul.addr %s216, 8
          %s218 = scalar_lea.hbm %s2, %s217
          %s219 = sshll.u32 %s208, 4
          %s220 = int_to_ptr.vmem [resolvable:$true] %s219
          %s221 = sshll.u32 %s218, 4
          %s222 = int_to_ptr.hbm [resolvable:$true] %s221
          %227 = dma.vmem_to_hbm [thread:$0]  %s220, 256, %s222, %s205, 128, 128, 8
        $region32: #{tpu_custom_call.1} parent=27 // pred_fallthru
          _
      $region28: #{tpu_custom_call.1} parent=5 // pred_fallthru
        _
      %p228 = scmp.le.s32.totalorder 2, %s11
      // Predicated region
      $region33: #{tpu_custom_call.1} parent=5 // pred_check
        %p229 = pneg %p228
      $region34: #{tpu_custom_call.1} parent=5 // pred_check_branch
        %231 = sbr.rel (%p229) target = $region36
      $region35: #{tpu_custom_call.1} parent=5 // pred_region
        %s232 = ssub.s32 %s11, 2
        // Predicated region
        $region37: #{tpu_custom_call.1} parent=35 // pred_check
          %p233 = pneg %p103
        $region38: #{tpu_custom_call.1} parent=35 // pred_check_branch
          %235 = sbr.rel (%p233) target = $region40
        $region39: #{tpu_custom_call.1} parent=35 // pred_region
          %s236 = sand.u32 %s88, 1
          %s237 = scalar_lea.sflag [#allocation3], %s236
          %s238 = sand.u32 %s88, 1
          %s239 = smul.addr %s238, 16
          %s240 = scalar_lea.vmem [#allocation2], %s239
          %242 = dma.done %s237, 256
        $region40: #{tpu_custom_call.1} parent=35 // pred_fallthru
          _
      $region36: #{tpu_custom_call.1} parent=5 // pred_fallthru
        _
    $region6: #{tpu_custom_call.1} parent=1 // loop_footer
      %s15 = sadd.s32 1, %s11
    $region7: #{tpu_custom_call.1} parent=1 // loop_footer_branch
      %10 = sbr.rel target = $region3
    $region8: #{tpu_custom_call.1} parent=1 // loop_exit
      _
    %243 = vsyncpa [#allocation3], 1
    %s244 = scalar_lea.sflag [#allocation3], 1
    %245 = vsyncpa %s244, 1

</llo_original>
